<compile_context>
chip_gen: v5e
topology: v5e:2x2
jax: 0.10.0
libtpu: 0.0.40
codegen_flags: <defaults>
</compile_context>

<pallas_src>
import functools

import jax
import jax.numpy as jnp
from jax import lax
from jax.experimental import pallas as pl
from jax.experimental.pallas import tpu as pltpu


# ----------------------------- Pallas kernels ------------------------------

def _linear_kernel(x_ref, w_ref, b_ref, o_ref):
    # (tm, K) @ (K, N) + bias -> written directly to the resident output block
    o_ref[...] = (jnp.dot(x_ref[...], w_ref[...],
                          preferred_element_type=jnp.float32)
                  + b_ref[...])


def linear(x, w, b, tm=256):
    """(M, K) @ (K, N) + bias[N] -> (M, N) f32, M tiled as a parallel grid axis."""
    M, K = x.shape
    K2, N = w.shape
    assert K == K2
    tm = min(tm, M)
    Mp = ((M + tm - 1) // tm) * tm
    if Mp != M:
        x = jnp.pad(x, ((0, Mp - M), (0, 0)))
    out = pl.pallas_call(
        _linear_kernel,
        out_shape=jax.ShapeDtypeStruct((Mp, N), jnp.float32),
        grid_spec=pltpu.PrefetchScalarGridSpec(
            num_scalar_prefetch=0,
            grid=(Mp // tm,),
            in_specs=[pl.BlockSpec((tm, K), lambda i: (i, 0)),
                      pl.BlockSpec((K, N), lambda i: (0, 0)),
                      pl.BlockSpec((1, N), lambda i: (0, 0))],
            out_specs=pl.BlockSpec((tm, N), lambda i: (i, 0))),
        compiler_params=pltpu.CompilerParams(
            dimension_semantics=("parallel",)),
    )(x, w, b.reshape(1, N))
    return out[:M] if Mp != M else out


def _clla_det_kernel(x2c_ref, loc_ref, wq_ref, bq_ref, wkv_ref, bkv_ref,
                     wdet_ref, bdet_ref, o_ref, *, att_range, ch):
    """Fused CLLA attention + residual + det 1x1 conv for one token tile."""
    r2 = att_range * att_range
    x2c = x2c_ref[...]                                           # (tm, ch)
    q = (jnp.dot(x2c, wq_ref[...], preferred_element_type=jnp.float32)
         + bq_ref[...])                                          # (tm, ch)

    inv_range = 1.0 / float(att_range)
    dots, vs = [], []
    for r in range(r2):                                          # unrolled, r2 small
        loc_r = loc_ref[r]                                       # (tm, ch)
        kv = (jnp.dot(loc_r, wkv_ref[...],
                      preferred_element_type=jnp.float32)
              + bkv_ref[...])                                    # (tm, 2ch)
        k_r = kv[:, :ch]
        v_r = kv[:, ch:]
        dots.append(jnp.sum(q * k_r, axis=-1, keepdims=True) * inv_range)
        vs.append(v_r)

    mean = sum(dots) * (1.0 / float(r2))                         # (tm, 1)
    irr = [2.0 * mean - d for d in dots]
    mx = functools.reduce(jnp.maximum, irr)                      # softmax (stable)
    es = [jnp.exp(e - mx) for e in irr]
    denom = sum(es)
    att = [e / denom for e in es]

    attn_out = sum(a * v for a, v in zip(att, vs))               # (tm, ch)
    f = (attn_out + x2c) * 0.5                                   # (out + x2) / 2
    o_ref[...] = (jnp.dot(f, wdet_ref[...],
                          preferred_element_type=jnp.float32)
                  + bdet_ref[...])                               # det conv


def clla_attention_det(x2c, local, wq, bq, wkv, bkv, wdet, bdet,
                       att_range, tm=256):
    """x2c: (M, ch); local: (r2, M, ch); returns det output (M, cout)."""
    M, ch = x2c.shape
    r2 = local.shape[0]
    cout = wdet.shape[1]
    tm = min(tm, M)
    Mp = ((M + tm - 1) // tm) * tm
    if Mp != M:
        x2c = jnp.pad(x2c, ((0, Mp - M), (0, 0)))
        local = jnp.pad(local, ((0, 0), (0, Mp - M), (0, 0)))

    kern = functools.partial(_clla_det_kernel, att_range=att_range, ch=ch)
    out = pl.pallas_call(
        kern,
        out_shape=jax.ShapeDtypeStruct((Mp, cout), jnp.float32),
        grid_spec=pltpu.PrefetchScalarGridSpec(
            num_scalar_prefetch=0,
            grid=(Mp // tm,),
            in_specs=[
                pl.BlockSpec((tm, ch), lambda i: (i, 0)),        # x2 conv out
                pl.BlockSpec((r2, tm, ch), lambda i: (0, i, 0)),  # local neighbours
                pl.BlockSpec((ch, ch), lambda i: (0, 0)),        # Wq
                pl.BlockSpec((1, ch), lambda i: (0, 0)),         # bq
                pl.BlockSpec((ch, 2 * ch), lambda i: (0, 0)),    # [Wk | Wv]
                pl.BlockSpec((1, 2 * ch), lambda i: (0, 0)),     # [bk | bv]
                pl.BlockSpec((ch, cout), lambda i: (0, 0)),      # Wdet
                pl.BlockSpec((1, cout), lambda i: (0, 0)),       # bdet
            ],
            out_specs=pl.BlockSpec((tm, cout), lambda i: (i, 0))),
        compiler_params=pltpu.CompilerParams(
            dimension_semantics=("parallel",)),
    )(x2c, local, wq, bq.reshape(1, ch), wkv, bkv.reshape(1, 2 * ch),
      wdet, bdet.reshape(1, cout))
    return out[:M] if Mp != M else out


# ------------------------- wrapper (CLLABlock.forward) ----------------------

def prepare_weights(p):
    """One-time weight relayout: (out,in) torch layout -> (K, N) matmul layout,
    with Wk|Wv concatenated for a single lane-dense matmul per neighbour."""
    return {
        'w_c1': p['conv1_w'].T, 'b_c1': p['conv1_b'],
        'w_c2': p['conv2_w'].T, 'b_c2': p['conv2_b'],
        'w_q': p['q_w'].T, 'b_q': p['q_b'],
        'w_kv': jnp.concatenate([p['k_w'].T, p['v_w'].T], axis=1),
        'b_kv': jnp.concatenate([p['k_b'], p['v_b']]),
        'w_det': p['det_w'].T, 'b_det': p['det_b'],
    }


def clla_block_forward(x1, x2, wp, att_range):
    B, c1, W1, H1 = x1.shape
    B2, c2, W2, H2 = x2.shape
    assert B == B2
    ch = wp['w_c1'].shape[1]
    cout = wp['w_det'].shape[1]
    r2 = att_range * att_range

    # 1x1 convs as lane-dense matmuls on flattened NHWC tokens
    x1f = jnp.transpose(x1, (0, 2, 3, 1)).reshape(B * W1 * H1, c1)
    x2f = jnp.transpose(x2, (0, 2, 3, 1)).reshape(B * W2 * H2, c2)
    y1 = linear(x1f, wp['w_c1'], wp['b_c1'])                    # (M1, ch)
    y2 = linear(x2f, wp['w_c2'], wp['b_c2'])                    # (M2, ch)

    # stride-2 neighbourhood gather (matches the PyTorch i::2 / j::2 slicing)
    y1_nhwc = y1.reshape(B, W1, H1, ch)
    pad = att_range // 2 - 1
    y1p = jnp.pad(y1_nhwc, ((0, 0), (pad, pad), (pad, pad), (0, 0)))
    loc = []
    for i in range(att_range):
        for j in range(att_range):
            loc.append(y1p[:, i::2, j::2, :][:, :W2, :H2, :])
    local = jnp.stack(loc, axis=0).reshape(r2, B * W2 * H2, ch)  # (r2, M2, ch)

    # fused attention + residual + det conv
    out = clla_attention_det(y2, local, wp['w_q'], wp['b_q'],
                             wp['w_kv'], wp['b_kv'],
                             wp['w_det'], wp['b_det'], att_range)  # (M2, cout)
    return jnp.transpose(out.reshape(B, W2, H2, cout), (0, 3, 1, 2))


# -------------------------- pure-JAX reference -----------------------------

def reference_forward(x1, x2, p, att_range):
    hp = lax.Precision.HIGHEST
    y1 = (jnp.einsum('bchw,oc->bohw', x1, p['conv1_w'], precision=hp)
          + p['conv1_b'][None, :, None, None])
    y2 = (jnp.einsum('bchw,oc->bohw', x2, p['conv2_w'], precision=hp)
          + p['conv2_b'][None, :, None, None])
    b, c, w2, h2 = y2.shape
    x2_ = jnp.transpose(y2, (0, 2, 3, 1))[:, :, :, None, :]      # (b,w2,h2,1,c)
    pad = att_range // 2 - 1
    y1p = jnp.pad(y1, ((0, 0), (0, 0), (pad, pad), (pad, pad)))
    local = []
    for i in range(att_range):
        for j in range(att_range):
            local.append(y1p[..., i::2, j::2][..., :w2, :h2][:, :, None, :, :])
    local = jnp.concatenate(local, axis=2)                       # (b,c,r2,w2,h2)
    x1l = jnp.transpose(local, (0, 3, 4, 2, 1))                  # (b,w2,h2,r2,c)
    q = jnp.einsum('bwhrc,oc->bwhro', x2_, p['q_w'], precision=hp) + p['q_b']
    k = jnp.einsum('bwhrc,oc->bwhro', x1l, p['k_w'], precision=hp) + p['k_b']
    v = jnp.einsum('bwhrc,oc->bwhro', x1l, p['v_w'], precision=hp) + p['v_b']
    dots = jnp.sum(q * k / att_range, axis=4)                    # (b,w2,h2,r2)
    irr = jnp.mean(dots, axis=3, keepdims=True) * 2 - dots
    att = jax.nn.softmax(irr, axis=-1)
    o = jnp.sum(v * att[..., None], axis=3)                      # (b,w2,h2,c)
    o = jnp.transpose(o, (0, 3, 1, 2))
    f = (o + y2) / 2
    det = (jnp.einsum('bchw,oc->bohw', f, p['det_w'], precision=hp)
           + p['det_b'][None, :, None, None])
    return det


# ------------------------------ parameters ---------------------------------

def init_params(key, ch1, ch2, ch, cout):
    ks = jax.random.split(key, 12)

    def w(k, o, i):
        return jax.random.normal(k, (o, i), jnp.float32) / jnp.sqrt(i)

    def bias(k, o):
        return 0.1 * jax.random.normal(k, (o,), jnp.float32)

    return {
        'conv1_w': w(ks[0], ch, ch1), 'conv1_b': bias(ks[1], ch),
        'conv2_w': w(ks[2], ch, ch2), 'conv2_b': bias(ks[3], ch),
        'q_w': w(ks[4], ch, ch), 'q_b': bias(ks[5], ch),
        'k_w': w(ks[6], ch, ch), 'k_b': bias(ks[7], ch),
        'v_w': w(ks[8], ch, ch), 'v_b': bias(ks[9], ch),
        'det_w': w(ks[10], cout, ch), 'det_b': bias(ks[11], cout),
    }


# --------------------------------- main -------------------------------------

if __name__ == "__main__":
    key = jax.random.PRNGKey(0)

    att_range = 2                       # CLLABlock default range
    ch1, ch2, ch, cout = 64, 128, 128, 128
    B = 2
    W1 = H1 = 16                        # x1 feature map (high res)
    W2 = H2 = 8                         # x2 feature map (low res)

    key, kp, k1, k2 = jax.random.split(key, 4)
    params = init_params(kp, ch1, ch2, ch, cout)
    x1 = jax.random.normal(k1, (B, ch1, W1, H1), jnp.float32)
    x2 = jax.random.normal(k2, (B, ch2, W2, H2), jnp.float32)

    wp = prepare_weights(params)        # one-time weight relayout
    out = clla_block_forward(x1, x2, wp, att_range)
    out = jax.block_until_ready(out)

    ref = reference_forward(x1, x2, params, att_range)
    assert out.shape == (B, cout, W2, H2), out.shape
    err = float(jnp.max(jnp.abs(out - ref)))
    assert err < 5e-3, f"max abs err {err}"

    print("KERNEL_OK")
</pallas_src>

<mosaic_0001>
module attributes {stable_mosaic.version = 11 : i64} {
  func.func @_linear_kernel(%arg0: i32, %arg1: memref<256x64xf32, #tpu.memory_space<vmem>>, %arg2: memref<64x128xf32, #tpu.memory_space<vmem>>, %arg3: memref<1x128xf32, #tpu.memory_space<vmem>>, %arg4: memref<256x128xf32, #tpu.memory_space<vmem>>) attributes {dimension_semantics = [#tpu.dimension_semantics<parallel>], iteration_bounds = array<i64: 2>, scalar_prefetch = 0 : i64, scratch_operands = 0 : i64, tpu.core_type = #tpu.core_type<tc>, window_params = [{transform_indices = @transform_0, window_bounds = array<i64: 256, 64>}, {pipeline_mode = #tpu.pipeline_mode<synchronous>, transform_indices = @transform_1, window_bounds = array<i64: 64, 128>}, {pipeline_mode = #tpu.pipeline_mode<synchronous>, transform_indices = @transform_2, window_bounds = array<i64: 1, 128>}, {transform_indices = @transform_3, window_bounds = array<i64: 256, 128>}]} {
    %c0 = arith.constant 0 : index
    %c0_0 = arith.constant 0 : index
    %0 = vector.load %arg1[%c0, %c0_0] : memref<256x64xf32, #tpu.memory_space<vmem>>, vector<256x64xf32>
    %c0_1 = arith.constant 0 : index
    %c0_2 = arith.constant 0 : index
    %1 = vector.load %arg2[%c0_1, %c0_2] : memref<64x128xf32, #tpu.memory_space<vmem>>, vector<64x128xf32>
    %cst = arith.constant dense<0.000000e+00> : vector<256x128xf32>
    %2 = tpu.matmul %0, %1, %cst {dimension_numbers = #tpu.dot_dimension_numbers<[1], [0], [0], [1], [0, 0, 1, 1], [], []>} : vector<256x64xf32>, vector<64x128xf32>, vector<256x128xf32> -> vector<256x128xf32>
    %c0_3 = arith.constant 0 : index
    %c0_4 = arith.constant 0 : index
    %3 = vector.load %arg3[%c0_3, %c0_4] : memref<1x128xf32, #tpu.memory_space<vmem>>, vector<1x128xf32>
    %4 = vector.broadcast %3 : vector<1x128xf32> to vector<256x128xf32>
    %5 = arith.addf %2, %4 : vector<256x128xf32>
    %c0_5 = arith.constant 0 : index
    %c0_6 = arith.constant 0 : index
    %6 = vector.load %arg4[%c0_5, %c0_6] : memref<256x128xf32, #tpu.memory_space<vmem>>, vector<256x128xf32>
    tpu.vector_store %arg4[%c0_5, %c0_6], %5 {strides = array<i32>} : memref<256x128xf32, #tpu.memory_space<vmem>>, vector<256x128xf32>,
    return
  }
  func.func @transform_0(%arg0: i32) -> (i32, i32) {
    %c0_i32 = arith.constant 0 : i32
    %c0_i32_0 = arith.constant 0 : i32
    return %arg0, %c0_i32 : i32, i32
  }
  func.func @transform_1(%arg0: i32) -> (i32, i32) {
    %c0_i32 = arith.constant 0 : i32
    %c0_i32_0 = arith.constant 0 : i32
    %c0_i32_1 = arith.constant 0 : i32
    return %c0_i32, %c0_i32_0 : i32, i32
  }
  func.func @transform_2(%arg0: i32) -> (i32, i32) {
    %c0_i32 = arith.constant 0 : i32
    %c0_i32_0 = arith.constant 0 : i32
    %c0_i32_1 = arith.constant 0 : i32
    return %c0_i32, %c0_i32_0 : i32, i32
  }
  func.func @transform_3(%arg0: i32) -> (i32, i32) {
    %c0_i32 = arith.constant 0 : i32
    %c0_i32_0 = arith.constant 0 : i32
    return %arg0, %c0_i32 : i32, i32
  }
}

</mosaic_0001>

<llo_original>
// kernel: tpu_custom_call.1
$region0: #{tpu_custom_call.1}
  #allocation0 [shape = 'u32[]', space=smem, size = 0x4, offset = 0x4, fixed_abs, tag = 'smem constant byte address 0x4 - core index']
  #allocation1 [shape = 'u32[72,128]{1,0:T(1,128)}', space=vmem, size = 0x9000, scoped, tag = 'internal scratch']
  %s0 = inlined_call_operand.vmem [shape: f32[512,64], index: 0, kind: input, shape index: {}]
  %s1 = inlined_call_operand.vmem [shape: f32[64,128], index: 1, kind: input, shape index: {}]
  %s2 = inlined_call_operand.vmem [shape: f32[1,128], index: 2, kind: input, shape index: {}]
  %s3 = inlined_call_operand.hbm [shape: f32[512,128], index: 3, kind: output, shape index: {}]
  %s4 = sld [smem:[#allocation0]]
  $region45: #{tpu_custom_call.1} parent=0
    _
  %s6 = ssub.s32 1, %s4
  %s7 = scalar_select 0, %s6, %s4
  $region1: #{tpu_custom_call.1} parent=0
    #allocation2 [shape = 'u8[262144]{0}', space=vmem, size = 0x40000, scoped, tag = 'output window, operand 0']
    #allocation3 [shape = 's32[2]{0}', space=sflag, size = 0x8, scoped, tag = 'scoped memory for tpu_custom_call.1']
    %8 = vsyncpa [#allocation3], 0
    %s9 = scalar_lea.sflag [#allocation3], 1
    %10 = vsyncpa %s9, 0
    loop: start=0, step=1, limit=4
    $region2: #{tpu_custom_call.1} parent=1 // loop_pre_header
      _
    $region3: #{tpu_custom_call.1} parent=1 // loop_header
      %s12 = sphi 0, %s16
      %p13 = scmp.ge.s32.totalorder %s12, 4
      %s22 = sphi 0, %s24
      %s25 = sphi 0, %s22
      %s26 = sphi 0, %s25
      %s42 = sphi 0, %s26
      %s46 = sphi 0, %s46
      %s48 = sphi 0, %s46
      %s49 = sphi 0, %s48
      %s63 = sphi 0, %s49
      %s67 = sphi 0, %s67
      %s69 = sphi 0, %s67
      %s70 = sphi 0, %s69
      %s84 = sphi 0, %s70
      %s90 = sphi 0, %s92
      %s93 = sphi 0, %s90
      %s94 = sphi 0, %s93
      %s110 = sphi 0, %s94
    $region4: #{tpu_custom_call.1} parent=1 // loop_header_branch
      %15 = sbr.rel (%p13) target = $region8
    $region5: #{tpu_custom_call.1} parent=1 // loop_body
      %s17 = ssub.s32 %s12, 1
      %s18 = ssub.s32 %s12, 2
      %s19 = sadd.s32 %s12, 1
      %s20 = ssub.s32 %s12, %s19
      %p21 = scmp.eq.s32.totalorder %s20, 0
      %s23 = sadd.s32 %s22, 1
      %s24 = scalar_select %p21, %s22, %s23
      %p27 = pneg %p21
      %p28 = scmp.eq.s32.totalorder %s12, 1
      %p29 = por %p27, %p28
      %p30 = scmp.ne.s32.totalorder %s22, %s25
      %p31 = scmp.eq.s32.totalorder %s12, 0
      %p32 = por %p30, %p31
      %p33 = scmp.ne.s32.totalorder %s22, %s25
      %p34 = scmp.eq.s32.totalorder %s17, 1
      %p35 = por %p33, %p34
      %p36 = scmp.ne.s32.totalorder %s25, %s26
      %p37 = scmp.eq.s32.totalorder %s17, 0
      %p38 = por %p36, %p37
      %p39 = scmp.ne.s32.totalorder %s25, %s26
      %p40 = scmp.eq.s32.totalorder %s18, 1
      %p41 = por %p39, %p40
      %p43 = scmp.ne.s32.totalorder %s26, %s42
      %p44 = scmp.eq.s32.totalorder %s18, 0
      %p45 = por %p43, %p44
      %s47 = sadd.s32 %s46, 1
      %p50 = scmp.eq.s32.totalorder %s12, 1
      %p51 = scmp.ne.s32.totalorder %s46, %s48
      %p52 = scmp.eq.s32.totalorder %s12, 0
      %p53 = por %p51, %p52
      %p54 = scmp.ne.s32.totalorder %s46, %s48
      %p55 = scmp.eq.s32.totalorder %s17, 1
      %p56 = por %p54, %p55
      %p57 = scmp.ne.s32.totalorder %s48, %s49
      %p58 = scmp.eq.s32.totalorder %s17, 0
      %p59 = por %p57, %p58
      %p60 = scmp.ne.s32.totalorder %s48, %s49
      %p61 = scmp.eq.s32.totalorder %s18, 1
      %p62 = por %p60, %p61
      %p64 = scmp.ne.s32.totalorder %s49, %s63
      %p65 = scmp.eq.s32.totalorder %s18, 0
      %p66 = por %p64, %p65
      %s68 = sadd.s32 %s67, 1
      %p71 = scmp.eq.s32.totalorder %s12, 1
      %p72 = scmp.ne.s32.totalorder %s67, %s69
      %p73 = scmp.eq.s32.totalorder %s12, 0
      %p74 = por %p72, %p73
      %p75 = scmp.ne.s32.totalorder %s67, %s69
      %p76 = scmp.eq.s32.totalorder %s17, 1
      %p77 = por %p75, %p76
      %p78 = scmp.ne.s32.totalorder %s69, %s70
      %p79 = scmp.eq.s32.totalorder %s17, 0
      %p80 = por %p78, %p79
      %p81 = scmp.ne.s32.totalorder %s69, %s70
      %p82 = scmp.eq.s32.totalorder %s18, 1
      %p83 = por %p81, %p82
      %p85 = scmp.ne.s32.totalorder %s70, %s84
      %p86 = scmp.eq.s32.totalorder %s18, 0
      %p87 = por %p85, %p86
      %s88 = ssub.s32 %s12, %s19
      %p89 = scmp.eq.s32.totalorder %s88, 0
      %s91 = sadd.s32 %s90, 1
      %s92 = scalar_select %p89, %s90, %s91
      %p95 = pneg %p89
      %p96 = scmp.eq.s32.totalorder %s12, 1
      %p97 = por %p95, %p96
      %p98 = scmp.ne.s32.totalorder %s90, %s93
      %p99 = scmp.eq.s32.totalorder %s12, 0
      %p100 = por %p98, %p99
      %p101 = scmp.ne.s32.totalorder %s90, %s93
      %p102 = scmp.eq.s32.totalorder %s17, 1
      %p103 = por %p101, %p102
      %p104 = scmp.ne.s32.totalorder %s93, %s94
      %p105 = scmp.eq.s32.totalorder %s17, 0
      %p106 = por %p104, %p105
      %p107 = scmp.ne.s32.totalorder %s93, %s94
      %p108 = scmp.eq.s32.totalorder %s18, 1
      %p109 = por %p107, %p108
      %p111 = scmp.ne.s32.totalorder %s94, %s110
      %p112 = scmp.eq.s32.totalorder %s18, 0
      %p113 = por %p111, %p112
      %p114 = scmp.le.s32.totalorder 1, %s12
      %p115 = scmp.lt.s32.totalorder %s12, 3
      %p116 = pnand %p114, %p115
      %p117 = pneg %p116
      // Predicated region
      $region9: #{tpu_custom_call.1} parent=5 // pred_check
        _
      $region10: #{tpu_custom_call.1} parent=5 // pred_check_branch
        %119 = sbr.rel (%p116) target = $region12
      $region11: #{tpu_custom_call.1} parent=5 // pred_region
        %s120 = ssub.s32 %s12, 1
        // Predicated region
        $region13: #{tpu_custom_call.1} parent=11 // pred_check
          %p121 = pneg %p59
        $region14: #{tpu_custom_call.1} parent=11 // pred_check_branch
          %123 = sbr.rel (%p121) target = $region16
        $region15: #{tpu_custom_call.1} parent=11 // pred_region
          _
        $region16: #{tpu_custom_call.1} parent=11 // pred_fallthru
          _
        // Predicated region
        $region17: #{tpu_custom_call.1} parent=11 // pred_check
          %p124 = pneg %p80
        $region18: #{tpu_custom_call.1} parent=11 // pred_check_branch
          %126 = sbr.rel (%p124) target = $region20
        $region19: #{tpu_custom_call.1} parent=11 // pred_region
          _
        $region20: #{tpu_custom_call.1} parent=11 // pred_fallthru
          _
      $region12: #{tpu_custom_call.1} parent=5 // pred_fallthru
        _
      %p127 = scmp.lt.s32.totalorder %s12, 2
      // Predicated region
      $region21: #{tpu_custom_call.1} parent=5 // pred_check
        %p128 = pneg %p127
      $region22: #{tpu_custom_call.1} parent=5 // pred_check_branch
        %130 = sbr.rel (%p128) target = $region24
      $region23: #{tpu_custom_call.1} parent=5 // pred_region
        // Predicated region
        $region25: #{tpu_custom_call.1} parent=23 // pred_check
          %p131 = pneg %p32
        $region26: #{tpu_custom_call.1} parent=23 // pred_check_branch
          %133 = sbr.rel (%p131) target = $region28
        $region27: #{tpu_custom_call.1} parent=23 // pred_region
          %s134 = smul.u32 32, %s12
          %p135 = scmp.lt.s32.totalorder %s134, 63
          %s136 = scalar_select %p135, %s134, 63
          %s137 = smul.addr %s136, 8
          %s138 = scalar_lea.vmem %s0, %s137
          %s139 = smul.u32 32, %s12
        $region28: #{tpu_custom_call.1} parent=23 // pred_fallthru
          _
      $region24: #{tpu_custom_call.1} parent=5 // pred_fallthru
        _
      %p140 = scmp.le.s32.totalorder 1, %s12
      %p141 = scmp.lt.s32.totalorder %s12, 3
      %p142 = pnand %p140, %p141
      %p143 = pneg %p142
      // Predicated region
      $region29: #{tpu_custom_call.1} parent=5 // pred_check
        _
      $region30: #{tpu_custom_call.1} parent=5 // pred_check_branch
        %145 = sbr.rel (%p142) target = $region32
      $region31: #{tpu_custom_call.1} parent=5 // pred_region
        %s146 = ssub.s32 %s12, 1
        %s147 = smul.u32 32, %s17
        %p148 = scmp.lt.s32.totalorder %s147, 63
        %s149 = scalar_select %p148, %s147, 63
        %s150 = smul.addr %s149, 8
        %s151 = scalar_lea.vmem %s0, %s150
        %p152 = pneg %p38
        %p153 = pneg %p35
        %p154 = pneg %p59
        %p155 = pneg %p56
        %p156 = pneg %p80
        %p157 = pneg %p77
        %p158 = pneg %p106
        %p159 = pneg %p103
        %s160 = sand.u32 %s93, 1
        %s161 = scalar_lea.sflag [#allocation3], %s160
        %s162 = sand.u32 %s93, 1
        %s163 = smul.addr %s162, 256
        %s164 = scalar_lea.vmem [#allocation2], %s163
        %s165 = smul.u32 32, %s17
        %p166 = scmp.lt.s32.totalorder %s165, 63
        %s167 = scalar_select %p166, %s165, 63
        %s168 = smul.addr %s167, 8
        %s169 = scalar_lea.vmem %s0, %s168
        %s170 = smul.u32 32, %s17
        %s171 = smul.u32 32, %s17
        %v172 = vld [vmem:[%s169] sm:$0xff]
        %v173 = vld [vmem:[%s169 + $0x8] sm:$0xff]
        %v174 = vld [vmem:[%s169 + $0x10] sm:$0xff]
        %v175 = vld [vmem:[%s169 + $0x18] sm:$0xff]
        %v176 = vld [vmem:[%s169 + $0x20] sm:$0xff]
        %v177 = vld [vmem:[%s169 + $0x28] sm:$0xff]
        %v178 = vld [vmem:[%s169 + $0x30] sm:$0xff]
        %v179 = vld [vmem:[%s169 + $0x38] sm:$0xff]
        %v180 = vld [vmem:[%s169 + $0x40] sm:$0xff]
        %v181 = vld [vmem:[%s169 + $0x48] sm:$0xff]
        %v182 = vld [vmem:[%s169 + $0x50] sm:$0xff]
        %v183 = vld [vmem:[%s169 + $0x58] sm:$0xff]
        %v184 = vld [vmem:[%s169 + $0x60] sm:$0xff]
        %v185 = vld [vmem:[%s169 + $0x68] sm:$0xff]
        %v186 = vld [vmem:[%s169 + $0x70] sm:$0xff]
        %v187 = vld [vmem:[%s169 + $0x78] sm:$0xff]
        %v188 = vld [vmem:[%s169 + $0x80] sm:$0xff]
        %v189 = vld [vmem:[%s169 + $0x88] sm:$0xff]
        %v190 = vld [vmem:[%s169 + $0x90] sm:$0xff]
        %v191 = vld [vmem:[%s169 + $0x98] sm:$0xff]
        %v192 = vld [vmem:[%s169 + $0xa0] sm:$0xff]
        %v193 = vld [vmem:[%s169 + $0xa8] sm:$0xff]
        %v194 = vld [vmem:[%s169 + $0xb0] sm:$0xff]
        %v195 = vld [vmem:[%s169 + $0xb8] sm:$0xff]
        %v196 = vld [vmem:[%s169 + $0xc0] sm:$0xff]
        %v197 = vld [vmem:[%s169 + $0xc8] sm:$0xff]
        %v198 = vld [vmem:[%s169 + $0xd0] sm:$0xff]
        %v199 = vld [vmem:[%s169 + $0xd8] sm:$0xff]
        %v200 = vld [vmem:[%s169 + $0xe0] sm:$0xff]
        %v201 = vld [vmem:[%s169 + $0xe8] sm:$0xff]
        %v202 = vld [vmem:[%s169 + $0xf0] sm:$0xff]
        %v203 = vld [vmem:[%s169 + $0xf8] sm:$0xff]
        %v204 = vld [vmem:[%s1] sm:$0xff]
        %v205 = vld [vmem:[%s1 + $0x8] sm:$0xff]
        %v206 = vld [vmem:[%s1 + $0x10] sm:$0xff]
        %v207 = vld [vmem:[%s1 + $0x18] sm:$0xff]
        %v208 = vld [vmem:[%s1 + $0x20] sm:$0xff]
        %v209 = vld [vmem:[%s1 + $0x28] sm:$0xff]
        %v210 = vld [vmem:[%s1 + $0x30] sm:$0xff]
        %v211 = vld [vmem:[%s1 + $0x38] sm:$0xff]
        %v212 = vld [vmem:[%s2] sm:$0x1]
        %v214 = vperm.slane %v212, 0
        %vm216 = vcmask 523264
        %v218 = vsel %vm216, %v172, 0
        %v221 = vsel %vm216, %v173, 0
        %v224 = vsel %vm216, %v174, 0
        %v227 = vsel %vm216, %v175, 0
        %v230 = vsel %vm216, %v176, 0
        %v233 = vsel %vm216, %v177, 0
        %v236 = vsel %vm216, %v178, 0
        %v239 = vsel %vm216, %v179, 0
        %v242 = vsel %vm216, %v180, 0
        %v245 = vsel %vm216, %v181, 0
        %v248 = vsel %vm216, %v182, 0
        %v251 = vsel %vm216, %v183, 0
        %v254 = vsel %vm216, %v184, 0
        %v257 = vsel %vm216, %v185, 0
        %v260 = vsel %vm216, %v186, 0
        %v263 = vsel %vm216, %v187, 0
        %v266 = vsel %vm216, %v188, 0
        %v269 = vsel %vm216, %v189, 0
        %v272 = vsel %vm216, %v190, 0
        %v275 = vsel %vm216, %v191, 0
        %v278 = vsel %vm216, %v192, 0
        %v281 = vsel %vm216, %v193, 0
        %v284 = vsel %vm216, %v194, 0
        %v287 = vsel %vm216, %v195, 0
        %v290 = vsel %vm216, %v196, 0
        %v293 = vsel %vm216, %v197, 0
        %v296 = vsel %vm216, %v198, 0
        %v299 = vsel %vm216, %v199, 0
        %v302 = vsel %vm216, %v200, 0
        %v305 = vsel %vm216, %v201, 0
        %v308 = vsel %vm216, %v202, 0
        %v311 = vsel %vm216, %v203, 0
        %313 = vmatpush.msra.mxu0 0.0
        %314 = vmatpush.msra.mxu0 0.0
        %315 = vmatpush.msra.mxu0 0.0
        %316 = vmatpush.msra.mxu0 0.0
        %317 = vmatpush.msra.mxu0 0.0
        %318 = vmatpush.msra.mxu0 0.0
        %319 = vmatpush.msra.mxu0 0.0
        %320 = vmatpush.msra.mxu0 0.0
        %321 = vmatpush.msra.mxu0 %v211
        %322 = vmatpush.msra.mxu0 %v210
        %323 = vmatpush.msra.mxu0 %v209
        %324 = vmatpush.msra.mxu0 %v208
        %325 = vmatpush.msra.mxu0 %v207
        %326 = vmatpush.msra.mxu0 %v206
        %327 = vmatpush.msra.mxu0 %v205
        %328 = vmatpush.msra.mxu0 %v204
        %329 = vmatmul.f32.gmra.mxu0 %v218
        %v330 = vpop.f32.mrf.mxu0
        %v331 = vadd.f32 %v214, %v330
        %332 = vmatmul.f32.gmra.mxu0 %v221
        %v333 = vpop.f32.mrf.mxu0
        %v334 = vadd.f32 %v214, %v333
        %335 = vmatmul.f32.gmra.mxu0 %v224
        %v336 = vpop.f32.mrf.mxu0
        %v337 = vadd.f32 %v214, %v336
        %338 = vmatmul.f32.gmra.mxu0 %v227
        %v339 = vpop.f32.mrf.mxu0
        %v340 = vadd.f32 %v214, %v339
        %341 = vmatmul.f32.gmra.mxu0 %v230
        %v342 = vpop.f32.mrf.mxu0
        %v343 = vadd.f32 %v214, %v342
        %344 = vmatmul.f32.gmra.mxu0 %v233
        %v345 = vpop.f32.mrf.mxu0
        %v346 = vadd.f32 %v214, %v345
        %347 = vmatmul.f32.gmra.mxu0 %v236
        %v348 = vpop.f32.mrf.mxu0
        %v349 = vadd.f32 %v214, %v348
        %350 = vmatmul.f32.gmra.mxu0 %v239
        %v351 = vpop.f32.mrf.mxu0
        %v352 = vadd.f32 %v214, %v351
        %353 = vmatmul.f32.gmra.mxu0 %v242
        %v354 = vpop.f32.mrf.mxu0
        %v355 = vadd.f32 %v214, %v354
        %356 = vmatmul.f32.gmra.mxu0 %v245
        %v357 = vpop.f32.mrf.mxu0
        %v358 = vadd.f32 %v214, %v357
        %359 = vmatmul.f32.gmra.mxu0 %v248
        %v360 = vpop.f32.mrf.mxu0
        %v361 = vadd.f32 %v214, %v360
        %362 = vmatmul.f32.gmra.mxu0 %v251
        %v363 = vpop.f32.mrf.mxu0
        %v364 = vadd.f32 %v214, %v363
        %365 = vmatmul.f32.gmra.mxu0 %v254
        %v366 = vpop.f32.mrf.mxu0
        %v367 = vadd.f32 %v214, %v366
        %368 = vmatmul.f32.gmra.mxu0 %v257
        %v369 = vpop.f32.mrf.mxu0
        %v370 = vadd.f32 %v214, %v369
        %371 = vmatmul.f32.gmra.mxu0 %v260
        %v372 = vpop.f32.mrf.mxu0
        %v373 = vadd.f32 %v214, %v372
        %374 = vmatmul.f32.gmra.mxu0 %v263
        %v375 = vpop.f32.mrf.mxu0
        %v376 = vadd.f32 %v214, %v375
        %377 = vmatmul.f32.gmra.mxu0 %v266
        %v378 = vpop.f32.mrf.mxu0
        %v379 = vadd.f32 %v214, %v378
        %380 = vmatmul.f32.gmra.mxu0 %v269
        %v381 = vpop.f32.mrf.mxu0
        %v382 = vadd.f32 %v214, %v381
        %383 = vmatmul.f32.gmra.mxu0 %v272
        %v384 = vpop.f32.mrf.mxu0
        %v385 = vadd.f32 %v214, %v384
        %386 = vmatmul.f32.gmra.mxu0 %v275
        %v387 = vpop.f32.mrf.mxu0
        %v388 = vadd.f32 %v214, %v387
        %389 = vmatmul.f32.gmra.mxu0 %v278
        %v390 = vpop.f32.mrf.mxu0
        %v391 = vadd.f32 %v214, %v390
        %392 = vmatmul.f32.gmra.mxu0 %v281
        %v393 = vpop.f32.mrf.mxu0
        %v394 = vadd.f32 %v214, %v393
        %395 = vmatmul.f32.gmra.mxu0 %v284
        %v396 = vpop.f32.mrf.mxu0
        %v397 = vadd.f32 %v214, %v396
        %398 = vmatmul.f32.gmra.mxu0 %v287
        %v399 = vpop.f32.mrf.mxu0
        %v400 = vadd.f32 %v214, %v399
        %401 = vmatmul.f32.gmra.mxu0 %v290
        %v402 = vpop.f32.mrf.mxu0
        %v403 = vadd.f32 %v214, %v402
        %404 = vmatmul.f32.gmra.mxu0 %v293
        %v405 = vpop.f32.mrf.mxu0
        %v406 = vadd.f32 %v214, %v405
        %407 = vmatmul.f32.gmra.mxu0 %v296
        %v408 = vpop.f32.mrf.mxu0
        %v409 = vadd.f32 %v214, %v408
        %410 = vmatmul.f32.gmra.mxu0 %v299
        %v411 = vpop.f32.mrf.mxu0
        %v412 = vadd.f32 %v214, %v411
        %413 = vmatmul.f32.gmra.mxu0 %v302
        %v414 = vpop.f32.mrf.mxu0
        %v415 = vadd.f32 %v214, %v414
        %416 = vmatmul.f32.gmra.mxu0 %v305
        %v417 = vpop.f32.mrf.mxu0
        %v418 = vadd.f32 %v214, %v417
        %419 = vmatmul.f32.gmra.mxu0 %v308
        %v420 = vpop.f32.mrf.mxu0
        %v421 = vadd.f32 %v214, %v420
        %422 = vmatmul.f32.gmra.mxu0 %v311
        %v423 = vpop.f32.mrf.mxu0
        %v424 = vadd.f32 %v214, %v423
        %425 = vdwg.mxu0
        %426 = vst [vmem:[%s164] sm:$0xff] %v331
        %427 = vst [vmem:[%s164 + $0x8] sm:$0xff] %v334
        %428 = vst [vmem:[%s164 + $0x10] sm:$0xff] %v337
        %429 = vst [vmem:[%s164 + $0x18] sm:$0xff] %v340
        %430 = vst [vmem:[%s164 + $0x20] sm:$0xff] %v343
        %431 = vst [vmem:[%s164 + $0x28] sm:$0xff] %v346
        %432 = vst [vmem:[%s164 + $0x30] sm:$0xff] %v349
        %433 = vst [vmem:[%s164 + $0x38] sm:$0xff] %v352
        %434 = vst [vmem:[%s164 + $0x40] sm:$0xff] %v355
        %435 = vst [vmem:[%s164 + $0x48] sm:$0xff] %v358
        %436 = vst [vmem:[%s164 + $0x50] sm:$0xff] %v361
        %437 = vst [vmem:[%s164 + $0x58] sm:$0xff] %v364
        %438 = vst [vmem:[%s164 + $0x60] sm:$0xff] %v367
        %439 = vst [vmem:[%s164 + $0x68] sm:$0xff] %v370
        %440 = vst [vmem:[%s164 + $0x70] sm:$0xff] %v373
        %441 = vst [vmem:[%s164 + $0x78] sm:$0xff] %v376
        %442 = vst [vmem:[%s164 + $0x80] sm:$0xff] %v379
        %443 = vst [vmem:[%s164 + $0x88] sm:$0xff] %v382
        %444 = vst [vmem:[%s164 + $0x90] sm:$0xff] %v385
        %445 = vst [vmem:[%s164 + $0x98] sm:$0xff] %v388
        %446 = vst [vmem:[%s164 + $0xa0] sm:$0xff] %v391
        %447 = vst [vmem:[%s164 + $0xa8] sm:$0xff] %v394
        %448 = vst [vmem:[%s164 + $0xb0] sm:$0xff] %v397
        %449 = vst [vmem:[%s164 + $0xb8] sm:$0xff] %v400
        %450 = vst [vmem:[%s164 + $0xc0] sm:$0xff] %v403
        %451 = vst [vmem:[%s164 + $0xc8] sm:$0xff] %v406
        %452 = vst [vmem:[%s164 + $0xd0] sm:$0xff] %v409
        %453 = vst [vmem:[%s164 + $0xd8] sm:$0xff] %v412
        %454 = vst [vmem:[%s164 + $0xe0] sm:$0xff] %v415
        %455 = vst [vmem:[%s164 + $0xe8] sm:$0xff] %v418
        %456 = vst [vmem:[%s164 + $0xf0] sm:$0xff] %v421
        %457 = vst [vmem:[%s164 + $0xf8] sm:$0xff] %v424
        %s458 = sand.u32 %s93, 1
        %s459 = scalar_lea.sflag [#allocation3], %s458
        %s460 = sand.u32 %s93, 1
        %s461 = smul.addr %s460, 256
        %s462 = scalar_lea.vmem [#allocation2], %s461
        // Predicated region
        $region33: #{tpu_custom_call.1} parent=31 // pred_check
          %p463 = pneg %p103
        $region34: #{tpu_custom_call.1} parent=31 // pred_check_branch
          %465 = sbr.rel (%p463) target = $region36
        $region35: #{tpu_custom_call.1} parent=31 // pred_region
          %s466 = smul.u32 32, %s17
          %468 = vsyncadd %s459, 0
          %s469 = smul.addr %s466, 8
          %s470 = scalar_lea.hbm %s3, %s469
          %s471 = sshll.u32 %s462, 4
          %s472 = int_to_ptr.vmem [resolvable:$true] %s471
          %s473 = sshll.u32 %s470, 4
          %s474 = int_to_ptr.hbm [resolvable:$true] %s473
          %479 = dma.vmem_to_hbm [thread:$0]  %s472, 4096, %s474, %s459, 128, 128, 8
        $region36: #{tpu_custom_call.1} parent=31 // pred_fallthru
          _
      $region32: #{tpu_custom_call.1} parent=5 // pred_fallthru
        _
      %p480 = scmp.le.s32.totalorder 2, %s12
      // Predicated region
      $region37: #{tpu_custom_call.1} parent=5 // pred_check
        %p481 = pneg %p480
      $region38: #{tpu_custom_call.1} parent=5 // pred_check_branch
        %483 = sbr.rel (%p481) target = $region40
      $region39: #{tpu_custom_call.1} parent=5 // pred_region
        %s484 = ssub.s32 %s12, 2
        // Predicated region
        $region41: #{tpu_custom_call.1} parent=39 // pred_check
          %p485 = pneg %p109
        $region42: #{tpu_custom_call.1} parent=39 // pred_check_branch
          %487 = sbr.rel (%p485) target = $region44
        $region43: #{tpu_custom_call.1} parent=39 // pred_region
          %s488 = sand.u32 %s94, 1
          %s489 = scalar_lea.sflag [#allocation3], %s488
          %s490 = sand.u32 %s94, 1
          %s491 = smul.addr %s490, 256
          %s492 = scalar_lea.vmem [#allocation2], %s491
          %494 = dma.done %s489, 4096
        $region44: #{tpu_custom_call.1} parent=39 // pred_fallthru
          _
      $region40: #{tpu_custom_call.1} parent=5 // pred_fallthru
        _
    $region6: #{tpu_custom_call.1} parent=1 // loop_footer
      %s16 = sadd.s32 1, %s12
    $region7: #{tpu_custom_call.1} parent=1 // loop_footer_branch
      %11 = sbr.rel target = $region3
    $region8: #{tpu_custom_call.1} parent=1 // loop_exit
      _
    %495 = vsyncpa [#allocation3], 1
    %s496 = scalar_lea.sflag [#allocation3], 1
    %497 = vsyncpa %s496, 1

</llo_original>
